<compile_context>
chip_gen: v7x
topology: tpu7x:2x2x1
jax: 0.10.0
libtpu: 0.0.40
codegen_flags: <defaults>
</compile_context>

<pallas_src>
import functools
import math

import jax
import jax.numpy as jnp
from jax.experimental import pallas as pl
from jax.experimental.pallas import tpu as pltpu


def _round_up(x, mult):
    return ((x + mult - 1) // mult) * mult


def _tpu_generation():
    """Best-effort TPU generation (5, 6, 7, ...) from device_kind; None if unknown."""
    try:
        kind = jax.devices()[0].device_kind.lower()
    except Exception:
        return None
    for gen in (7, 6, 5, 4):
        if f"v{gen}" in kind:
            return gen
    return None


def _kde_kernel(f_ref, hf_ref, dsT_ref, hds_ref, scale_ref, out_ref, acc_ref,
                *, exp_in_bf16):
    # f_ref:     (TN, D)    transformed queries (resident across the M grid axis)
    # hf_ref:    (TN, 1)    0.5 * ||f||^2 per query
    # dsT_ref:   (D, TM)    dataset tile, dataset axis lane-dense
    # hds_ref:   (1, TM)    0.5 * ||ds||^2 per dataset row (1e30 on padded rows)
    # scale_ref: (1, 1)     norm / M, in SMEM
    # out_ref:   (1, TN, 1) partial estimate for this M-split
    # acc_ref:   (TN, 1)    f32 accumulator scratch
    k = pl.program_id(2)

    @pl.when(k == 0)
    def _():
        acc_ref[...] = jnp.zeros_like(acc_ref)

    # Cross term on the MXU.  K = D is tiny and the MXU has huge slack, so keep
    # HIGHEST precision (sq is later formed by cancellation and exponentiated).
    cross = jax.lax.dot_general(
        f_ref[...], dsT_ref[...], (((1,), (0,)), ((), ())),
        precision=jax.lax.Precision.HIGHEST,
        preferred_element_type=jnp.float32)                     # (TN, TM)

    # -0.5*||ds - f||^2 = f.ds - 0.5||ds||^2 - 0.5||f||^2  (constants folded).
    arg = cross - hds_ref[...] - hf_ref[...]                    # (TN, TM)
    arg = jnp.minimum(arg, 0.0)       # guard cancellation-induced positives

    if exp_in_bf16:
        # bf16 EUP path (v6e / v7x): exp is the saturating unit.  Reduce over
        # the lane (TM) axis on the otherwise-idle MXU with f32 accumulation.
        w = jnp.exp(arg.astype(jnp.bfloat16))                   # (TN, TM) bf16
        ones = jnp.ones((w.shape[1], 1), jnp.bfloat16)
        partial = jax.lax.dot_general(
            w, ones, (((1,), (0,)), ((), ())),
            preferred_element_type=jnp.float32)                 # (TN, 1) f32
    else:
        w = jnp.exp(arg)                                        # (TN, TM) f32
        partial = jnp.sum(w, axis=-1, keepdims=True)            # (TN, 1)

    acc_ref[...] += partial

    @pl.when(k == pl.num_programs(2) - 1)
    def _():
        out_ref[0] = (acc_ref[...] * scale_ref[0, 0]).astype(out_ref.dtype)


def gaussian_kde_forward(features, bw_transform, dataset, norm,
                         *, tile_m=None, n_splits=None, exp_in_bf16=None):
    """Pallas implementation of GaussianKDE.forward. Returns shape (N,)."""
    n, d = features.shape
    m, d2 = dataset.shape
    assert d == d2 and bw_transform.shape == (d, d)

    gen = _tpu_generation()
    if exp_in_bf16 is None:
        # v5e has no bf16 EUP path; keep f32 there.  On v6e/v7x bf16 exp is a
        # speed/accuracy tradeoff (~3 decimal digits in the exp argument).
        exp_in_bf16 = gen is not None and gen >= 6
    if n_splits is None:
        # Split the M reduction across v7x's two TensorCores when the N axis
        # only has a single block; elsewhere it would just be a serial split.
        n_splits = 2 if (gen == 7 and n <= 128 and m >= 256) else 1

    features = features.astype(jnp.float32)
    bw_transform = bw_transform.astype(jnp.float32)
    dataset = dataset.astype(jnp.float32)

    # Query-side work hoisted out of the reduction grid.
    f = jnp.dot(features, bw_transform,
                precision=jax.lax.Precision.HIGHEST)             # (N, D)
    half_fnorm = 0.5 * jnp.sum(f * f, axis=-1, keepdims=True)    # (N, 1)

    # Dataset side: transpose so the M axis is lane-dense; pre-halve the norms.
    dsT = dataset.T                                              # (D, M)
    half_dsnorm = 0.5 * jnp.sum(dataset * dataset, axis=-1)      # (M,)

    # --- N tiling (pad to a multiple of 128 only when N > 128). ---
    if n <= 128:
        tile_n, n_pad = n, n
    else:
        tile_n = 128
        n_pad = _round_up(n, tile_n)
    if n_pad != n:
        f = jnp.pad(f, ((0, n_pad - n), (0, 0)))
        half_fnorm = jnp.pad(half_fnorm, ((0, n_pad - n), (0, 0)))

    # --- M tiling: large tiles (DMA/VMEM are non-issues here; amortize grid
    # step overhead).  Padded rows get half_dsnorm = 1e30 so exp -> 0 exactly
    # and no per-step tail mask is needed. ---
    m_per_split = pl.cdiv(m, n_splits)
    if tile_m is None:
        tile_m = _round_up(m_per_split, 128) if m_per_split <= 4096 else 4096
    else:
        tile_m = _round_up(tile_m, 128)
    mb = pl.cdiv(m_per_split, tile_m)            # M blocks per split
    m_pad = n_splits * mb * tile_m
    if m_pad != m:
        dsT = jnp.pad(dsT, ((0, 0), (0, m_pad - m)))             # zero rows
        half_dsnorm = jnp.pad(half_dsnorm, (0, m_pad - m),
                              constant_values=1e30)
    half_dsnorm = half_dsnorm.reshape(1, m_pad)

    scale = (jnp.asarray(norm, jnp.float32) / m).reshape(1, 1)   # norm / M

    grid = (n_splits, n_pad // tile_n, mb)
    kernel = functools.partial(_kde_kernel, exp_in_bf16=exp_in_bf16)

    out = pl.pallas_call(
        kernel,
        out_shape=jax.ShapeDtypeStruct((n_splits, n_pad, 1), jnp.float32),
        grid_spec=pltpu.PrefetchScalarGridSpec(
            num_scalar_prefetch=0,
            grid=grid,
            in_specs=[
                pl.BlockSpec((tile_n, d), lambda s, i, k: (i, 0)),           # f
                pl.BlockSpec((tile_n, 1), lambda s, i, k: (i, 0)),           # 0.5||f||^2
                pl.BlockSpec((d, tile_m), lambda s, i, k: (0, s * mb + k)),  # dataset.T
                pl.BlockSpec((1, tile_m), lambda s, i, k: (0, s * mb + k)),  # 0.5||ds||^2
                pl.BlockSpec(memory_space=pltpu.MemorySpace.SMEM),           # norm / M
            ],
            out_specs=pl.BlockSpec((1, tile_n, 1), lambda s, i, k: (s, i, 0)),
            scratch_shapes=[pltpu.VMEM((tile_n, 1), jnp.float32)],
        ),
        compiler_params=pltpu.CompilerParams(
            dimension_semantics=("parallel", "parallel", "arbitrary"),
        ),
    )(f, half_fnorm, dsT, half_dsnorm, scale)

    # Sum the per-split partials and drop padded query rows.
    return jnp.sum(out, axis=0)[:n, 0]


def gaussian_kde_fit(dataset):
    """Plain-JAX equivalent of GaussianKDE.fit (one-time setup glue).

    Returns (bw_transform, transformed_dataset, norm).
    """
    # TODO(synk): linalg.inv / cholesky have no Pallas equivalent; kept in JAX.
    dataset = dataset.astype(jnp.float32)
    num_samples, dimension = dataset.shape
    factor = num_samples ** (-1.0 / (dimension + 4))

    t = dataset.T                                    # (D, M)
    mean = jnp.mean(t, axis=1, keepdims=True)
    centered = t - mean
    cov = centered @ centered.T / (t.shape[1] - 1)   # (D, D) unbiased

    inv_cov = jnp.linalg.inv(cov) / (factor ** 2)
    bw_transform = jnp.linalg.cholesky(inv_cov)      # lower-triangular, like torch

    transformed_dataset = dataset @ bw_transform
    norm = jnp.prod(jnp.diag(bw_transform)) * math.pow(2 * math.pi, -dimension / 2)
    return bw_transform, transformed_dataset, norm


def _reference_forward(features, bw_transform, dataset, norm):
    """Pure-JAX reference matching the PyTorch loop semantics."""
    f = jnp.dot(features, bw_transform, precision=jax.lax.Precision.HIGHEST)
    diff = dataset[None, :, :] - f[:, None, :]
    sq = jnp.sum(diff * diff, axis=-1)
    emb = jnp.exp(-sq / 2) * norm
    return jnp.mean(emb, axis=1)


if __name__ == "__main__":
    key = jax.random.PRNGKey(0)
    k1, k2, k3, k4 = jax.random.split(key, 4)

    # ---- Case 1: module-like small shapes, default tiling (single M step). ----
    num_samples, dimension = 300, 8   # KDE dataset: (M, D)
    n_queries = 24                    # features:    (N, D)
    fit_dataset = jax.random.normal(k1, (num_samples, dimension), dtype=jnp.float32)
    features = jax.random.normal(k2, (n_queries, dimension), dtype=jnp.float32)
    bw_transform, kde_dataset, norm = gaussian_kde_fit(fit_dataset)
    ref1 = _reference_forward(features, bw_transform, kde_dataset, norm)

    # f32-exp path: tight correctness check against the pure-JAX reference.
    est_f32 = gaussian_kde_forward(features, bw_transform, kde_dataset, norm,
                                   exp_in_bf16=False)
    est_f32 = jax.block_until_ready(est_f32)
    assert est_f32.shape == (n_queries,)
    assert bool(jnp.allclose(est_f32, ref1, rtol=2e-3, atol=1e-12)), (est_f32, ref1)

    # Auto path (bf16 exp on v6e/v7x): looser check -- documented speed/accuracy
    # tradeoff of ~3 decimal digits in the exp argument.
    est_auto = gaussian_kde_forward(features, bw_transform, kde_dataset, norm)
    est_auto = jax.block_until_ready(est_auto)
    assert est_auto.shape == (n_queries,)
    assert bool(jnp.all(jnp.isfinite(est_auto)))
    assert bool(jnp.allclose(est_auto, ref1, rtol=1.5e-1, atol=1e-12)), (est_auto, ref1)

    # ---- Case 2: exercises N > 128 tiling, multi-step M reduction, padded
    # dataset tail, and the split-M partials path (forced n_splits=2). ----
    m2, n2 = 1000, 200
    fit_dataset2 = jax.random.normal(k3, (m2, dimension), dtype=jnp.float32)
    features2 = jax.random.normal(k4, (n2, dimension), dtype=jnp.float32)
    bw2, kde_dataset2, norm2 = gaussian_kde_fit(fit_dataset2)
    est2 = gaussian_kde_forward(features2, bw2, kde_dataset2, norm2,
                                tile_m=256, n_splits=2, exp_in_bf16=False)
    est2 = jax.block_until_ready(est2)
    ref2 = _reference_forward(features2, bw2, kde_dataset2, norm2)
    assert est2.shape == (n2,)
    assert bool(jnp.allclose(est2, ref2, rtol=2e-3, atol=1e-12)), (est2, ref2)

    print("KERNEL_OK")
</pallas_src>

<mosaic_0001>
module attributes {stable_mosaic.version = 11 : i64} {
  func.func @_kde_kernel(%arg0: i32, %arg1: i32, %arg2: i32, %arg3: memref<24x8xf32, #tpu.memory_space<vmem>>, %arg4: memref<24x1xf32, #tpu.memory_space<vmem>>, %arg5: memref<8x384xf32, #tpu.memory_space<vmem>>, %arg6: memref<1x384xf32, #tpu.memory_space<vmem>>, %arg7: memref<1x1xf32, #tpu.memory_space<smem>>, %arg8: memref<1x24x1xf32, #tpu.memory_space<vmem>>, %arg9: memref<24x1xf32, #tpu.memory_space<vmem>>) attributes {dimension_semantics = [#tpu.dimension_semantics<parallel>, #tpu.dimension_semantics<parallel>, #tpu.dimension_semantics<arbitrary>], iteration_bounds = array<i64: 1, 1, 1>, scalar_prefetch = 0 : i64, scratch_operands = 1 : i64, tpu.core_type = #tpu.core_type<tc>, window_params = [{transform_indices = @transform_0, window_bounds = array<i64: 24, 8>}, {transform_indices = @transform_1, window_bounds = array<i64: 24, 1>}, {transform_indices = @transform_2, window_bounds = array<i64: 8, 384>}, {transform_indices = @transform_3, window_bounds = array<i64: 1, 384>}, {transform_indices = @transform_4, window_bounds = array<i64: 1, 1>}, {transform_indices = @transform_5, window_bounds = array<i64: 1, 24, 1>}]} {
    %c0_i32 = arith.constant 0 : i32
    %0 = arith.cmpi eq, %arg2, %c0_i32 : i32
    %1 = arith.extui %0 : i1 to i32
    %c0_i32_0 = arith.constant 0 : i32
    %2 = arith.cmpi ne, %1, %c0_i32_0 : i32
    scf.if %2 {
      %cst_16 = arith.constant 0.000000e+00 : f32
      %23 = vector.broadcast %cst_16 : f32 to vector<24x1xf32>
      %c0_17 = arith.constant 0 : index
      %c0_18 = arith.constant 0 : index
      %24 = vector.load %arg9[%c0_17, %c0_18] : memref<24x1xf32, #tpu.memory_space<vmem>>, vector<24x1xf32>
      tpu.vector_store %arg9[%c0_17, %c0_18], %23 {strides = array<i32>} : memref<24x1xf32, #tpu.memory_space<vmem>>, vector<24x1xf32>,
    } else {
    }
    %c0 = arith.constant 0 : index
    %c0_1 = arith.constant 0 : index
    %3 = vector.load %arg3[%c0, %c0_1] : memref<24x8xf32, #tpu.memory_space<vmem>>, vector<24x8xf32>
    %c0_2 = arith.constant 0 : index
    %c0_3 = arith.constant 0 : index
    %4 = vector.load %arg5[%c0_2, %c0_3] : memref<8x384xf32, #tpu.memory_space<vmem>>, vector<8x384xf32>
    %cst = arith.constant dense<0.000000e+00> : vector<24x384xf32>
    %5 = tpu.matmul %3, %4, %cst {dimension_numbers = #tpu.dot_dimension_numbers<[1], [0], [0], [1], [0, 0, 1, 1], [], []>, precision = #tpu.contract_precision<fp32>} : vector<24x8xf32>, vector<8x384xf32>, vector<24x384xf32> -> vector<24x384xf32>
    %c0_4 = arith.constant 0 : index
    %c0_5 = arith.constant 0 : index
    %6 = vector.load %arg6[%c0_4, %c0_5] : memref<1x384xf32, #tpu.memory_space<vmem>>, vector<1x384xf32>
    %7 = vector.broadcast %6 : vector<1x384xf32> to vector<24x384xf32>
    %8 = arith.subf %5, %7 : vector<24x384xf32>
    %c0_6 = arith.constant 0 : index
    %c0_7 = arith.constant 0 : index
    %9 = vector.load %arg4[%c0_6, %c0_7] : memref<24x1xf32, #tpu.memory_space<vmem>>, vector<24x1xf32>
    %10 = vector.broadcast %9 : vector<24x1xf32> to vector<24x384xf32>
    %11 = arith.subf %8, %10 : vector<24x384xf32>
    %cst_8 = arith.constant 0.000000e+00 : f32
    %12 = vector.broadcast %cst_8 : f32 to vector<24x384xf32>
    %13 = arith.minimumf %11, %12 : vector<24x384xf32>
    %14 = math.exp %13 : vector<24x384xf32>
    %cst_9 = arith.constant dense<0.000000e+00> : vector<24xf32>
    %15 = vector.multi_reduction <add>, %14, %cst_9 [1] : vector<24x384xf32> to vector<24xf32>
    %16 = vector.shape_cast %15 : vector<24xf32> to vector<24x1xf32>
    %c0_10 = arith.constant 0 : index
    %c0_11 = arith.constant 0 : index
    %17 = vector.load %arg9[%c0_10, %c0_11] : memref<24x1xf32, #tpu.memory_space<vmem>>, vector<24x1xf32>
    %18 = arith.addf %17, %16 : vector<24x1xf32>
    %c0_12 = arith.constant 0 : index
    %c0_13 = arith.constant 0 : index
    %19 = vector.load %arg9[%c0_12, %c0_13] : memref<24x1xf32, #tpu.memory_space<vmem>>, vector<24x1xf32>
    tpu.vector_store %arg9[%c0_12, %c0_13], %18 {strides = array<i32>} : memref<24x1xf32, #tpu.memory_space<vmem>>, vector<24x1xf32>,
    %c0_i32_14 = arith.constant 0 : i32
    %20 = arith.cmpi eq, %arg2, %c0_i32_14 : i32
    %21 = arith.extui %20 : i1 to i32
    %c0_i32_15 = arith.constant 0 : i32
    %22 = arith.cmpi ne, %21, %c0_i32_15 : i32
    scf.if %22 {
      %c0_16 = arith.constant 0 : index
      %c0_17 = arith.constant 0 : index
      %23 = vector.load %arg9[%c0_16, %c0_17] : memref<24x1xf32, #tpu.memory_space<vmem>>, vector<24x1xf32>
      %c0_18 = arith.constant 0 : index
      %c0_19 = arith.constant 0 : index
      %24 = memref.load %arg7[%c0_18, %c0_19] : memref<1x1xf32, #tpu.memory_space<smem>>
      %25 = vector.broadcast %24 : f32 to vector<24x1xf32>
      %26 = arith.mulf %23, %25 : vector<24x1xf32>
      %c0_20 = arith.constant 0 : index
      %c0_21 = arith.constant 0 : index
      %c0_22 = arith.constant 0 : index
      %27 = vector.load %arg8[%c0_20, %c0_21, %c0_22] : memref<1x24x1xf32, #tpu.memory_space<vmem>>, vector<1x24x1xf32>
      %28 = vector.shape_cast %27 : vector<1x24x1xf32> to vector<24x1xf32>
      %29 = vector.shape_cast %26 : vector<24x1xf32> to vector<1x24x1xf32>
      tpu.vector_store %arg8[%c0_20, %c0_21, %c0_22], %29 {strides = array<i32>} : memref<1x24x1xf32, #tpu.memory_space<vmem>>, vector<1x24x1xf32>,
    } else {
    }
    return
  }
  func.func @transform_0(%arg0: i32, %arg1: i32, %arg2: i32) -> (i32, i32) {
    %c0_i32 = arith.constant 0 : i32
    %c0_i32_0 = arith.constant 0 : i32
    return %arg1, %c0_i32 : i32, i32
  }
  func.func @transform_1(%arg0: i32, %arg1: i32, %arg2: i32) -> (i32, i32) {
    %c0_i32 = arith.constant 0 : i32
    %c0_i32_0 = arith.constant 0 : i32
    return %arg1, %c0_i32 : i32, i32
  }
  func.func @transform_2(%arg0: i32, %arg1: i32, %arg2: i32) -> (i32, i32) {
    %c1_i32 = arith.constant 1 : i32
    %0 = arith.muli %arg0, %c1_i32 : i32
    %1 = arith.addi %0, %arg2 : i32
    %c0_i32 = arith.constant 0 : i32
    %c0_i32_0 = arith.constant 0 : i32
    return %c0_i32, %1 : i32, i32
  }
  func.func @transform_3(%arg0: i32, %arg1: i32, %arg2: i32) -> (i32, i32) {
    %c1_i32 = arith.constant 1 : i32
    %0 = arith.muli %arg0, %c1_i32 : i32
    %1 = arith.addi %0, %arg2 : i32
    %c0_i32 = arith.constant 0 : i32
    %c0_i32_0 = arith.constant 0 : i32
    return %c0_i32, %1 : i32, i32
  }
  func.func @transform_4(%arg0: i32, %arg1: i32, %arg2: i32) -> (i32, i32) {
    %c0_i32 = arith.constant 0 : i32
    %c0_i32_0 = arith.constant 0 : i32
    %c0_i32_1 = arith.constant 0 : i32
    return %c0_i32, %c0_i32_0 : i32, i32
  }
  func.func @transform_5(%arg0: i32, %arg1: i32, %arg2: i32) -> (i32, i32, i32) {
    %c0_i32 = arith.constant 0 : i32
    %c0_i32_0 = arith.constant 0 : i32
    return %arg0, %arg1, %c0_i32 : i32, i32, i32
  }
}

</mosaic_0001>

<llo_original>
// kernel: tpu_custom_call.1
$region0: #{tpu_custom_call.1}
  #allocation0 [shape = 'u32[]', space=smem, size = 0x4, offset = 0x4, fixed_abs, tag = 'smem constant byte address 0x4 - core index']
  #allocation1 [shape = 'u32[144,128]{1,0:T(1,128)}', space=vmem, size = 0x12000, scoped, tag = 'internal scratch']
  #allocation2 [shape = 'f32[24,1]{1,0:T(8,128)}', space=vmem, size = 0x3000, scoped, tag = 'scratch operand']
  #allocation3 [shape = 'f32[1,1]{1,0:T(1,128)S(6)}', space=smem, size = 0x200, scoped, tag = 'scoped memory for tpu_custom_call.1']
  %s0 = inlined_call_operand.vmem [shape: f32[24,8], index: 0, kind: input, shape index: {}]
  %s1 = inlined_call_operand.vmem [shape: f32[24,1], index: 1, kind: input, shape index: {}]
  %s2 = inlined_call_operand.vmem [shape: f32[8,384], index: 2, kind: input, shape index: {}]
  %s3 = inlined_call_operand.vmem [shape: f32[1,384], index: 3, kind: input, shape index: {}]
  %s4 = inlined_call_operand.<no memory space> [shape: f32[1,1], index: 4, kind: input, shape index: {}]
  %s5 = inlined_call_operand.vmem [shape: f32[1,24,1], index: 5, kind: output, shape index: {}]
  %s6 = sld [smem:[#allocation0]]
  $region38: #{tpu_custom_call.1} parent=0
    _
  %s8 = ssub.s32 1, %s6
  %s9 = scalar_select 0, %s8, %s6
  %10 = sst [smem:[#allocation3]] %s4
  // Predicated region
  $region2: #{tpu_custom_call.1} parent=0 // pred_check
    _
  $region3: #{tpu_custom_call.1} parent=0 // pred_check_branch
    %12 = sbr.rel (0) target = $region5
  $region4: #{tpu_custom_call.1} parent=0 // pred_region
    _
  $region5: #{tpu_custom_call.1} parent=0 // pred_fallthru
    _
  // Predicated region
  $region6: #{tpu_custom_call.1} parent=0 // pred_check
    _
  $region7: #{tpu_custom_call.1} parent=0 // pred_check_branch
    %14 = sbr.rel (0) target = $region9
  $region8: #{tpu_custom_call.1} parent=0 // pred_region
    _
  $region9: #{tpu_custom_call.1} parent=0 // pred_fallthru
    _
  // Predicated region
  $region10: #{tpu_custom_call.1} parent=0 // pred_check
    _
  $region11: #{tpu_custom_call.1} parent=0 // pred_check_branch
    %16 = sbr.rel (0) target = $region13
  $region12: #{tpu_custom_call.1} parent=0 // pred_region
    %s17 = sadd.s32 0, 0
    %s18 = smul.u32 3, %s17
    %p19 = scmp.lt.s32.totalorder %s18, 2
    %s20 = scalar_select %p19, %s18, 2
    %s21 = smul.addr %s20, 8
    %s22 = scalar_lea.vmem %s2, %s21
    %s23 = sadd.s32 0, 0
    %s24 = smul.u32 3, %s23
  $region13: #{tpu_custom_call.1} parent=0 // pred_fallthru
    _
  // Predicated region
  $region14: #{tpu_custom_call.1} parent=0 // pred_check
    _
  $region15: #{tpu_custom_call.1} parent=0 // pred_check_branch
    %26 = sbr.rel (0) target = $region17
  $region16: #{tpu_custom_call.1} parent=0 // pred_region
    %s27 = sadd.s32 0, 0
    %s28 = smul.u32 3, %s27
    %p29 = scmp.lt.s32.totalorder %s28, 2
    %s30 = scalar_select %p29, %s28, 2
    %s31 = scalar_lea.vmem %s3, %s30
    %s32 = sadd.s32 0, 0
    %s33 = smul.u32 3, %s32
  $region17: #{tpu_custom_call.1} parent=0 // pred_fallthru
    _
  // Predicated region
  $region18: #{tpu_custom_call.1} parent=0 // pred_check
    _
  $region19: #{tpu_custom_call.1} parent=0 // pred_check_branch
    %35 = sbr.rel (0) target = $region21
  $region20: #{tpu_custom_call.1} parent=0 // pred_region
    _
  $region21: #{tpu_custom_call.1} parent=0 // pred_fallthru
    _
  %s36 = sadd.s32 0, 0
  %s37 = smul.u32 3, %s36
  %p38 = scmp.lt.s32.totalorder %s37, 2
  %s39 = scalar_select %p38, %s37, 2
  %s40 = smul.addr %s39, 8
  %s41 = scalar_lea.vmem %s2, %s40
  %s42 = sadd.s32 0, 0
  %s43 = smul.u32 3, %s42
  %p44 = scmp.lt.s32.totalorder %s43, 2
  %s45 = scalar_select %p44, %s43, 2
  %s46 = scalar_lea.vmem %s3, %s45
  %s47 = sadd.s32 0, 0
  %s48 = smul.u32 3, %s47
  %p49 = scmp.lt.s32.totalorder %s48, 2
  %s50 = scalar_select %p49, %s48, 2
  %s51 = smul.addr %s50, 8
  %s52 = scalar_lea.vmem %s2, %s51
  %s53 = sadd.s32 0, 0
  %s54 = smul.u32 3, %s53
  %s55 = sadd.s32 0, 0
  %s56 = smul.u32 3, %s55
  %p57 = scmp.lt.s32.totalorder %s56, 2
  %s58 = scalar_select %p57, %s56, 2
  %s59 = scalar_lea.vmem %s3, %s58
  %s60 = sadd.s32 0, 0
  %s61 = smul.u32 3, %s60
  %p62 = scmp.eq.s32.totalorder 0, 0
  // Predicated region
  $region22: #{tpu_custom_call.1} parent=0 // pred_check
    %p63 = pneg %p62
  $region23: #{tpu_custom_call.1} parent=0 // pred_check_branch
    %65 = sbr.rel (%p63) target = $region25
  $region24: #{tpu_custom_call.1} parent=0 // pred_region
    %vm66 = vcmask 7168
    %67 = vst.msk [vmem:[#allocation2] sm:$0xff] %vm66, 0.0
    %68 = vst.msk [vmem:[#allocation2 + $0x8] sm:$0xff] %vm66, 0.0
    %69 = vst.msk [vmem:[#allocation2 + $0x10] sm:$0xff] %vm66, 0.0
  $region25: #{tpu_custom_call.1} parent=0 // pred_fallthru
    _
  %v70 = vld [vmem:[%s0] sm:$0xff]
  %v71 = vld [vmem:[%s0 + $0x8] sm:$0xff]
  %v72 = vld [vmem:[%s0 + $0x10] sm:$0xff]
  %v73 = vld [vmem:[%s52] sm:$0xff]
  %v74 = vld [vmem:[%s52 + $0x8] sm:$0xff]
  %v75 = vld [vmem:[%s52 + $0x10] sm:$0xff]
  %vm76 = vcmask 64512
  %v78 = vsel %vm76, %v70, 0
  %v81 = vsel %vm76, %v71, 0
  %v84 = vsel %vm76, %v72, 0
  %v86 = vand.u32 %v74, 4294901760
  %87 = vmatprep.subr.mxu0 %v86
  %v88 = vand.u32 %v73, 4294901760
  %89 = vmatpush1.msra.mxu0 %v88
  %90 = vmatprep.subr.mxu0 0.0
  %91 = vmatpush1.msra.mxu0 0.0
  %92 = vmatprep.subr.mxu0 0.0
  %93 = vmatpush1.msra.mxu0 0.0
  %94 = vmatprep.subr.mxu0 0.0
  %95 = vmatpush1.msra.mxu0 0.0
  %96 = vmatprep.subr.mxu0 0.0
  %97 = vmatpush1.msra.mxu0 0.0
  %98 = vmatprep.subr.mxu0 0.0
  %99 = vmatpush1.msra.mxu0 0.0
  %100 = vmatprep.subr.mxu0 0.0
  %101 = vmatpush1.msra.mxu0 0.0
  %102 = vmatprep.subr.mxu0 0.0
  %103 = vmatpush1.msra.mxu0 0.0
  %104 = vmatprep.subr.mxu0 0.0
  %105 = vmatpush1.msra.mxu0 0.0
  %106 = vmatprep.subr.mxu0 0.0
  %107 = vmatpush1.msra.mxu0 0.0
  %108 = vmatprep.subr.mxu0 0.0
  %109 = vmatpush1.msra.mxu0 0.0
  %110 = vmatprep.subr.mxu0 0.0
  %111 = vmatpush1.msra.mxu0 0.0
  %112 = vmatprep.subr.mxu0 0.0
  %113 = vmatpush1.msra.mxu0 0.0
  %114 = vmatprep.subr.mxu0 0.0
  %115 = vmatpush1.msra.mxu0 0.0
  %116 = vmatprep.subr.mxu0 0.0
  %117 = vmatpush1.msra.mxu0 0.0
  %118 = vmatprep.subr.mxu0 0.0
  %119 = vmatpush1.msra.mxu0 0.0
  %120 = vmatprep.subr.mxu0 0.0
  %121 = vmatpush1.msra.mxu0 0.0
  %122 = vmatprep.subr.mxu0 0.0
  %123 = vmatpush1.msra.mxu0 0.0
  %124 = vmatprep.subr.mxu0 0.0
  %125 = vmatpush1.msra.mxu0 0.0
  %126 = vmatprep.subr.mxu0 0.0
  %127 = vmatpush1.msra.mxu0 0.0
  %128 = vmatprep.subr.mxu0 0.0
  %129 = vmatpush1.msra.mxu0 0.0
  %130 = vmatprep.subr.mxu0 0.0
  %131 = vmatpush1.msra.mxu0 0.0
  %132 = vmatprep.subr.mxu0 0.0
  %133 = vmatpush1.msra.mxu0 0.0
  %134 = vmatprep.subr.mxu0 0.0
  %135 = vmatpush1.msra.mxu0 0.0
  %136 = vmatprep.subr.mxu0 0.0
  %137 = vmatpush1.msra.mxu0 0.0
  %138 = vmatprep.subr.mxu0 0.0
  %139 = vmatpush1.msra.mxu0 0.0
  %140 = vmatprep.subr.mxu0 0.0
  %141 = vmatpush1.msra.mxu0 0.0
  %142 = vmatprep.subr.mxu0 0.0
  %143 = vmatpush1.msra.mxu0 0.0
  %144 = vmatprep.subr.mxu0 0.0
  %145 = vmatpush1.msra.mxu0 0.0
  %146 = vmatprep.subr.mxu0 0.0
  %147 = vmatpush1.msra.mxu0 0.0
  %148 = vmatprep.subr.mxu0 0.0
  %149 = vmatpush1.msra.mxu0 0.0
  %150 = vmatprep.subr.mxu0 0.0
  %151 = vmatpush1.msra.mxu0 0.0
  %152 = vmatprep.mubr.f32.mxu0 0.0
  %v153 = vand.u32 %v78, 4294901760
  %v154 = vsub.f32 %v78, %v153
  %v155 = vand.u32 %v154, 4294901760
  %v156 = vsub.f32 %v154, %v155
  %v157 = vand.u32 %v156, 4294901760
  %158 = vmatmul.mubr.f32.gmra.mrb[0].mxu0 %v157
  %v159 = vpop.f32.mrb[0].mxu0
  %v160 = vadd.f32 0.0, %v159
  %v161 = vpop.f32.mrb[0].mxu0
  %v162 = vadd.f32 0.0, %v161
  %163 = vmatprep.mubr.f32.mxu0 0.0
  %v164 = vand.u32 %v81, 4294901760
  %v165 = vsub.f32 %v81, %v164
  %v166 = vand.u32 %v165, 4294901760
  %v167 = vsub.f32 %v165, %v166
  %v168 = vand.u32 %v167, 4294901760
  %169 = vmatmul.mubr.f32.gmra.mrb[0].mxu0 %v168
  %v170 = vpop.f32.mrb[0].mxu0
  %v171 = vadd.f32 0.0, %v170
  %v172 = vpop.f32.mrb[0].mxu0
  %v173 = vadd.f32 0.0, %v172
  %174 = vmatprep.mubr.f32.mxu0 0.0
  %v175 = vand.u32 %v84, 4294901760
  %v176 = vsub.f32 %v84, %v175
  %v177 = vand.u32 %v176, 4294901760
  %v178 = vsub.f32 %v176, %v177
  %v179 = vand.u32 %v178, 4294901760
  %180 = vmatmul.mubr.f32.gmra.mrb[0].mxu0 %v179
  %v181 = vpop.f32.mrb[0].mxu0
  %v182 = vadd.f32 0.0, %v181
  %v183 = vpop.f32.mrb[0].mxu0
  %v184 = vadd.f32 0.0, %v183
  %185 = vdwg.mxu0
  %v186 = vand.u32 %v74, 4294901760
  %v187 = vsub.f32 %v74, %v186
  %v188 = vand.u32 %v187, 4294901760
  %v189 = vsub.f32 %v187, %v188
  %v190 = vand.u32 %v189, 4294901760
  %191 = vmatprep.subr.mxu0 %v190
  %v192 = vand.u32 %v73, 4294901760
  %v193 = vsub.f32 %v73, %v192
  %v194 = vand.u32 %v193, 4294901760
  %v195 = vsub.f32 %v193, %v194
  %v196 = vand.u32 %v195, 4294901760
  %197 = vmatpush1.msra.mxu0 %v196
  %198 = vmatprep.subr.mxu0 0.0
  %199 = vmatpush1.msra.mxu0 0.0
  %200 = vmatprep.subr.mxu0 0.0
  %201 = vmatpush1.msra.mxu0 0.0
  %202 = vmatprep.subr.mxu0 0.0
  %203 = vmatpush1.msra.mxu0 0.0
  %204 = vmatprep.subr.mxu0 0.0
  %205 = vmatpush1.msra.mxu0 0.0
  %206 = vmatprep.subr.mxu0 0.0
  %207 = vmatpush1.msra.mxu0 0.0
  %208 = vmatprep.subr.mxu0 0.0
  %209 = vmatpush1.msra.mxu0 0.0
  %210 = vmatprep.subr.mxu0 0.0
  %211 = vmatpush1.msra.mxu0 0.0
  %212 = vmatprep.subr.mxu0 0.0
  %213 = vmatpush1.msra.mxu0 0.0
  %214 = vmatprep.subr.mxu0 0.0
  %215 = vmatpush1.msra.mxu0 0.0
  %216 = vmatprep.subr.mxu0 0.0
  %217 = vmatpush1.msra.mxu0 0.0
  %218 = vmatprep.subr.mxu0 0.0
  %219 = vmatpush1.msra.mxu0 0.0
  %220 = vmatprep.subr.mxu0 0.0
  %221 = vmatpush1.msra.mxu0 0.0
  %222 = vmatprep.subr.mxu0 0.0
  %223 = vmatpush1.msra.mxu0 0.0
  %224 = vmatprep.subr.mxu0 0.0
  %225 = vmatpush1.msra.mxu0 0.0
  %226 = vmatprep.subr.mxu0 0.0
  %227 = vmatpush1.msra.mxu0 0.0
  %228 = vmatprep.subr.mxu0 0.0
  %229 = vmatpush1.msra.mxu0 0.0
  %230 = vmatprep.subr.mxu0 0.0
  %231 = vmatpush1.msra.mxu0 0.0
  %232 = vmatprep.subr.mxu0 0.0
  %233 = vmatpush1.msra.mxu0 0.0
  %234 = vmatprep.subr.mxu0 0.0
  %235 = vmatpush1.msra.mxu0 0.0
  %236 = vmatprep.subr.mxu0 0.0
  %237 = vmatpush1.msra.mxu0 0.0
  %238 = vmatprep.subr.mxu0 0.0
  %239 = vmatpush1.msra.mxu0 0.0
  %240 = vmatprep.subr.mxu0 0.0
  %241 = vmatpush1.msra.mxu0 0.0
  %242 = vmatprep.subr.mxu0 0.0
  %243 = vmatpush1.msra.mxu0 0.0
  %244 = vmatprep.subr.mxu0 0.0
  %245 = vmatpush1.msra.mxu0 0.0
  %246 = vmatprep.subr.mxu0 0.0
  %247 = vmatpush1.msra.mxu0 0.0
  %248 = vmatprep.subr.mxu0 0.0
  %249 = vmatpush1.msra.mxu0 0.0
  %250 = vmatprep.subr.mxu0 0.0
  %251 = vmatpush1.msra.mxu0 0.0
  %252 = vmatprep.subr.mxu0 0.0
  %253 = vmatpush1.msra.mxu0 0.0
  %254 = vmatprep.subr.mxu0 0.0
  %255 = vmatpush1.msra.mxu0 0.0
  %256 = vmatprep.subr.mxu0 0.0
  %257 = vmatpush1.msra.mxu0 0.0
  %258 = vmatprep.subr.mxu0 0.0
  %259 = vmatpush1.msra.mxu0 0.0
  %260 = vmatprep.mubr.f32.mxu0 0.0
  %v261 = vand.u32 %v78, 4294901760
  %262 = vmatmul.mubr.f32.gmra.mrb[0].mxu0 %v261
  %v263 = vpop.f32.mrb[0].mxu0
  %v264 = vadd.f32 %v160, %v263
  %v265 = vpop.f32.mrb[0].mxu0
  %v266 = vadd.f32 %v162, %v265
  %267 = vmatprep.mubr.f32.mxu0 0.0
  %v268 = vand.u32 %v81, 4294901760
  %269 = vmatmul.mubr.f32.gmra.mrb[0].mxu0 %v268
  %v270 = vpop.f32.mrb[0].mxu0
  %v271 = vadd.f32 %v171, %v270
  %v272 = vpop.f32.mrb[0].mxu0
  %v273 = vadd.f32 %v173, %v272
  %274 = vmatprep.mubr.f32.mxu0 0.0
  %v275 = vand.u32 %v84, 4294901760
  %276 = vmatmul.mubr.f32.gmra.mrb[0].mxu0 %v275
  %v277 = vpop.f32.mrb[0].mxu0
  %v278 = vadd.f32 %v182, %v277
  %v279 = vpop.f32.mrb[0].mxu0
  %v280 = vadd.f32 %v184, %v279
  %281 = vdwg.mxu0
  %v282 = vand.u32 %v74, 4294901760
  %v283 = vsub.f32 %v74, %v282
  %284 = vmatprep.subr.mxu0 %v283
  %v285 = vand.u32 %v73, 4294901760
  %v286 = vsub.f32 %v73, %v285
  %287 = vmatpush1.msra.mxu0 %v286
  %288 = vmatprep.subr.mxu0 0.0
  %289 = vmatpush1.msra.mxu0 0.0
  %290 = vmatprep.subr.mxu0 0.0
  %291 = vmatpush1.msra.mxu0 0.0
  %292 = vmatprep.subr.mxu0 0.0
  %293 = vmatpush1.msra.mxu0 0.0
  %294 = vmatprep.subr.mxu0 0.0
  %295 = vmatpush1.msra.mxu0 0.0
  %296 = vmatprep.subr.mxu0 0.0
  %297 = vmatpush1.msra.mxu0 0.0
  %298 = vmatprep.subr.mxu0 0.0
  %299 = vmatpush1.msra.mxu0 0.0
  %300 = vmatprep.subr.mxu0 0.0
  %301 = vmatpush1.msra.mxu0 0.0
  %302 = vmatprep.subr.mxu0 0.0
  %303 = vmatpush1.msra.mxu0 0.0
  %304 = vmatprep.subr.mxu0 0.0
  %305 = vmatpush1.msra.mxu0 0.0
  %306 = vmatprep.subr.mxu0 0.0
  %307 = vmatpush1.msra.mxu0 0.0
  %308 = vmatprep.subr.mxu0 0.0
  %309 = vmatpush1.msra.mxu0 0.0
  %310 = vmatprep.subr.mxu0 0.0
  %311 = vmatpush1.msra.mxu0 0.0
  %312 = vmatprep.subr.mxu0 0.0
  %313 = vmatpush1.msra.mxu0 0.0
  %314 = vmatprep.subr.mxu0 0.0
  %315 = vmatpush1.msra.mxu0 0.0
  %316 = vmatprep.subr.mxu0 0.0
  %317 = vmatpush1.msra.mxu0 0.0
  %318 = vmatprep.subr.mxu0 0.0
  %319 = vmatpush1.msra.mxu0 0.0
  %320 = vmatprep.subr.mxu0 0.0
  %321 = vmatpush1.msra.mxu0 0.0
  %322 = vmatprep.subr.mxu0 0.0
  %323 = vmatpush1.msra.mxu0 0.0
  %324 = vmatprep.subr.mxu0 0.0
  %325 = vmatpush1.msra.mxu0 0.0
  %326 = vmatprep.subr.mxu0 0.0
  %327 = vmatpush1.msra.mxu0 0.0
  %328 = vmatprep.subr.mxu0 0.0
  %329 = vmatpush1.msra.mxu0 0.0
  %330 = vmatprep.subr.mxu0 0.0
  %331 = vmatpush1.msra.mxu0 0.0
  %332 = vmatprep.subr.mxu0 0.0
  %333 = vmatpush1.msra.mxu0 0.0
  %334 = vmatprep.subr.mxu0 0.0
  %335 = vmatpush1.msra.mxu0 0.0
  %336 = vmatprep.subr.mxu0 0.0
  %337 = vmatpush1.msra.mxu0 0.0
  %338 = vmatprep.subr.mxu0 0.0
  %339 = vmatpush1.msra.mxu0 0.0
  %340 = vmatprep.subr.mxu0 0.0
  %341 = vmatpush1.msra.mxu0 0.0
  %342 = vmatprep.subr.mxu0 0.0
  %343 = vmatpush1.msra.mxu0 0.0
  %344 = vmatprep.subr.mxu0 0.0
  %345 = vmatpush1.msra.mxu0 0.0
  %346 = vmatprep.subr.mxu0 0.0
  %347 = vmatpush1.msra.mxu0 0.0
  %348 = vmatprep.subr.mxu0 0.0
  %349 = vmatpush1.msra.mxu0 0.0
  %350 = vmatprep.mubr.f32.mxu0 0.0
  %v351 = vand.u32 %v78, 4294901760
  %v352 = vsub.f32 %v78, %v351
  %353 = vmatmul.mubr.f32.gmra.mrb[0].mxu0 %v352
  %v354 = vpop.f32.mrb[0].mxu0
  %v355 = vadd.f32 %v264, %v354
  %v356 = vpop.f32.mrb[0].mxu0
  %v357 = vadd.f32 %v266, %v356
  %358 = vmatprep.mubr.f32.mxu0 0.0
  %v359 = vand.u32 %v81, 4294901760
  %v360 = vsub.f32 %v81, %v359
  %361 = vmatmul.mubr.f32.gmra.mrb[0].mxu0 %v360
  %v362 = vpop.f32.mrb[0].mxu0
  %v363 = vadd.f32 %v271, %v362
  %v364 = vpop.f32.mrb[0].mxu0
  %v365 = vadd.f32 %v273, %v364
  %366 = vmatprep.mubr.f32.mxu0 0.0
  %v367 = vand.u32 %v84, 4294901760
  %v368 = vsub.f32 %v84, %v367
  %369 = vmatmul.mubr.f32.gmra.mrb[0].mxu0 %v368
  %v370 = vpop.f32.mrb[0].mxu0
  %v371 = vadd.f32 %v278, %v370
  %v372 = vpop.f32.mrb[0].mxu0
  %v373 = vadd.f32 %v280, %v372
  %374 = vdwg.mxu0
  %v375 = vand.u32 %v74, 4294901760
  %376 = vmatprep.subr.mxu0 %v375
  %v377 = vand.u32 %v73, 4294901760
  %378 = vmatpush1.msra.mxu0 %v377
  %379 = vmatprep.subr.mxu0 0.0
  %380 = vmatpush1.msra.mxu0 0.0
  %381 = vmatprep.subr.mxu0 0.0
  %382 = vmatpush1.msra.mxu0 0.0
  %383 = vmatprep.subr.mxu0 0.0
  %384 = vmatpush1.msra.mxu0 0.0
  %385 = vmatprep.subr.mxu0 0.0
  %386 = vmatpush1.msra.mxu0 0.0
  %387 = vmatprep.subr.mxu0 0.0
  %388 = vmatpush1.msra.mxu0 0.0
  %389 = vmatprep.subr.mxu0 0.0
  %390 = vmatpush1.msra.mxu0 0.0
  %391 = vmatprep.subr.mxu0 0.0
  %392 = vmatpush1.msra.mxu0 0.0
  %393 = vmatprep.subr.mxu0 0.0
  %394 = vmatpush1.msra.mxu0 0.0
  %395 = vmatprep.subr.mxu0 0.0
  %396 = vmatpush1.msra.mxu0 0.0
  %397 = vmatprep.subr.mxu0 0.0
  %398 = vmatpush1.msra.mxu0 0.0
  %399 = vmatprep.subr.mxu0 0.0
  %400 = vmatpush1.msra.mxu0 0.0
  %401 = vmatprep.subr.mxu0 0.0
  %402 = vmatpush1.msra.mxu0 0.0
  %403 = vmatprep.subr.mxu0 0.0
  %404 = vmatpush1.msra.mxu0 0.0
  %405 = vmatprep.subr.mxu0 0.0
  %406 = vmatpush1.msra.mxu0 0.0
  %407 = vmatprep.subr.mxu0 0.0
  %408 = vmatpush1.msra.mxu0 0.0
  %409 = vmatprep.subr.mxu0 0.0
  %410 = vmatpush1.msra.mxu0 0.0
  %411 = vmatprep.subr.mxu0 0.0
  %412 = vmatpush1.msra.mxu0 0.0
  %413 = vmatprep.subr.mxu0 0.0
  %414 = vmatpush1.msra.mxu0 0.0
  %415 = vmatprep.subr.mxu0 0.0
  %416 = vmatpush1.msra.mxu0 0.0
  %417 = vmatprep.subr.mxu0 0.0
  %418 = vmatpush1.msra.mxu0 0.0
  %419 = vmatprep.subr.mxu0 0.0
  %420 = vmatpush1.msra.mxu0 0.0
  %421 = vmatprep.subr.mxu0 0.0
  %422 = vmatpush1.msra.mxu0 0.0
  %423 = vmatprep.subr.mxu0 0.0
  %424 = vmatpush1.msra.mxu0 0.0
  %425 = vmatprep.subr.mxu0 0.0
  %426 = vmatpush1.msra.mxu0 0.0
  %427 = vmatprep.subr.mxu0 0.0
  %428 = vmatpush1.msra.mxu0 0.0
  %429 = vmatprep.subr.mxu0 0.0
  %430 = vmatpush1.msra.mxu0 0.0
  %431 = vmatprep.subr.mxu0 0.0
  %432 = vmatpush1.msra.mxu0 0.0
  %433 = vmatprep.subr.mxu0 0.0
  %434 = vmatpush1.msra.mxu0 0.0
  %435 = vmatprep.subr.mxu0 0.0
  %436 = vmatpush1.msra.mxu0 0.0
  %437 = vmatprep.subr.mxu0 0.0
  %438 = vmatpush1.msra.mxu0 0.0
  %439 = vmatprep.subr.mxu0 0.0
  %440 = vmatpush1.msra.mxu0 0.0
  %441 = vmatprep.mubr.f32.mxu0 0.0
  %v442 = vand.u32 %v78, 4294901760
  %v443 = vsub.f32 %v78, %v442
  %v444 = vand.u32 %v443, 4294901760
  %445 = vmatmul.mubr.f32.gmra.mrb[0].mxu0 %v444
  %v446 = vpop.f32.mrb[0].mxu0
  %v447 = vadd.f32 %v355, %v446
  %v448 = vpop.f32.mrb[0].mxu0
  %v449 = vadd.f32 %v357, %v448
  %450 = vmatprep.mubr.f32.mxu0 0.0
  %v451 = vand.u32 %v81, 4294901760
  %v452 = vsub.f32 %v81, %v451
  %v453 = vand.u32 %v452, 4294901760
  %454 = vmatmul.mubr.f32.gmra.mrb[0].mxu0 %v453
  %v455 = vpop.f32.mrb[0].mxu0
  %v456 = vadd.f32 %v363, %v455
  %v457 = vpop.f32.mrb[0].mxu0
  %v458 = vadd.f32 %v365, %v457
  %459 = vmatprep.mubr.f32.mxu0 0.0
  %v460 = vand.u32 %v84, 4294901760
  %v461 = vsub.f32 %v84, %v460
  %v462 = vand.u32 %v461, 4294901760
  %463 = vmatmul.mubr.f32.gmra.mrb[0].mxu0 %v462
  %v464 = vpop.f32.mrb[0].mxu0
  %v465 = vadd.f32 %v371, %v464
  %v466 = vpop.f32.mrb[0].mxu0
  %v467 = vadd.f32 %v373, %v466
  %468 = vdwg.mxu0
  %v469 = vand.u32 %v74, 4294901760
  %v470 = vsub.f32 %v74, %v469
  %v471 = vand.u32 %v470, 4294901760
  %472 = vmatprep.subr.mxu0 %v471
  %v473 = vand.u32 %v73, 4294901760
  %v474 = vsub.f32 %v73, %v473
  %v475 = vand.u32 %v474, 4294901760
  %476 = vmatpush1.msra.mxu0 %v475
  %477 = vmatprep.subr.mxu0 0.0
  %478 = vmatpush1.msra.mxu0 0.0
  %479 = vmatprep.subr.mxu0 0.0
  %480 = vmatpush1.msra.mxu0 0.0
  %481 = vmatprep.subr.mxu0 0.0
  %482 = vmatpush1.msra.mxu0 0.0
  %483 = vmatprep.subr.mxu0 0.0
  %484 = vmatpush1.msra.mxu0 0.0
  %485 = vmatprep.subr.mxu0 0.0
  %486 = vmatpush1.msra.mxu0 0.0
  %487 = vmatprep.subr.mxu0 0.0
  %488 = vmatpush1.msra.mxu0 0.0
  %489 = vmatprep.subr.mxu0 0.0
  %490 = vmatpush1.msra.mxu0 0.0
  %491 = vmatprep.subr.mxu0 0.0
  %492 = vmatpush1.msra.mxu0 0.0
  %493 = vmatprep.subr.mxu0 0.0
  %494 = vmatpush1.msra.mxu0 0.0
  %495 = vmatprep.subr.mxu0 0.0
  %496 = vmatpush1.msra.mxu0 0.0
  %497 = vmatprep.subr.mxu0 0.0
  %498 = vmatpush1.msra.mxu0 0.0
  %499 = vmatprep.subr.mxu0 0.0
  %500 = vmatpush1.msra.mxu0 0.0
  %501 = vmatprep.subr.mxu0 0.0
  %502 = vmatpush1.msra.mxu0 0.0
  %503 = vmatprep.subr.mxu0 0.0
  %504 = vmatpush1.msra.mxu0 0.0
  %505 = vmatprep.subr.mxu0 0.0
  %506 = vmatpush1.msra.mxu0 0.0
  %507 = vmatprep.subr.mxu0 0.0
  %508 = vmatpush1.msra.mxu0 0.0
  %509 = vmatprep.subr.mxu0 0.0
  %510 = vmatpush1.msra.mxu0 0.0
  %511 = vmatprep.subr.mxu0 0.0
  %512 = vmatpush1.msra.mxu0 0.0
  %513 = vmatprep.subr.mxu0 0.0
  %514 = vmatpush1.msra.mxu0 0.0
  %515 = vmatprep.subr.mxu0 0.0
  %516 = vmatpush1.msra.mxu0 0.0
  %517 = vmatprep.subr.mxu0 0.0
  %518 = vmatpush1.msra.mxu0 0.0
  %519 = vmatprep.subr.mxu0 0.0
  %520 = vmatpush1.msra.mxu0 0.0
  %521 = vmatprep.subr.mxu0 0.0
  %522 = vmatpush1.msra.mxu0 0.0
  %523 = vmatprep.subr.mxu0 0.0
  %524 = vmatpush1.msra.mxu0 0.0
  %525 = vmatprep.subr.mxu0 0.0
  %526 = vmatpush1.msra.mxu0 0.0
  %527 = vmatprep.subr.mxu0 0.0
  %528 = vmatpush1.msra.mxu0 0.0
  %529 = vmatprep.subr.mxu0 0.0
  %530 = vmatpush1.msra.mxu0 0.0
  %531 = vmatprep.subr.mxu0 0.0
  %532 = vmatpush1.msra.mxu0 0.0
  %533 = vmatprep.subr.mxu0 0.0
  %534 = vmatpush1.msra.mxu0 0.0
  %535 = vmatprep.subr.mxu0 0.0
  %536 = vmatpush1.msra.mxu0 0.0
  %537 = vmatprep.subr.mxu0 0.0
  %538 = vmatpush1.msra.mxu0 0.0
  %539 = vmatprep.mubr.f32.mxu0 0.0
  %v540 = vand.u32 %v78, 4294901760
  %541 = vmatmul.mubr.f32.gmra.mrb[0].mxu0 %v540
  %v542 = vpop.f32.mrb[0].mxu0
  %v543 = vadd.f32 %v447, %v542
  %v544 = vpop.f32.mrb[0].mxu0
  %v545 = vadd.f32 %v449, %v544
  %546 = vmatprep.mubr.f32.mxu0 0.0
  %v547 = vand.u32 %v81, 4294901760
  %548 = vmatmul.mubr.f32.gmra.mrb[0].mxu0 %v547
  %v549 = vpop.f32.mrb[0].mxu0
  %v550 = vadd.f32 %v456, %v549
  %v551 = vpop.f32.mrb[0].mxu0
  %v552 = vadd.f32 %v458, %v551
  %553 = vmatprep.mubr.f32.mxu0 0.0
  %v554 = vand.u32 %v84, 4294901760
  %555 = vmatmul.mubr.f32.gmra.mrb[0].mxu0 %v554
  %v556 = vpop.f32.mrb[0].mxu0
  %v557 = vadd.f32 %v465, %v556
  %v558 = vpop.f32.mrb[0].mxu0
  %v559 = vadd.f32 %v467, %v558
  %560 = vdwg.mxu0
  %v561 = vand.u32 %v74, 4294901760
  %562 = vmatprep.subr.mxu0 %v561
  %v563 = vand.u32 %v73, 4294901760
  %564 = vmatpush1.msra.mxu0 %v563
  %565 = vmatprep.subr.mxu0 0.0
  %566 = vmatpush1.msra.mxu0 0.0
  %567 = vmatprep.subr.mxu0 0.0
  %568 = vmatpush1.msra.mxu0 0.0
  %569 = vmatprep.subr.mxu0 0.0
  %570 = vmatpush1.msra.mxu0 0.0
  %571 = vmatprep.subr.mxu0 0.0
  %572 = vmatpush1.msra.mxu0 0.0
  %573 = vmatprep.subr.mxu0 0.0
  %574 = vmatpush1.msra.mxu0 0.0
  %575 = vmatprep.subr.mxu0 0.0
  %576 = vmatpush1.msra.mxu0 0.0
  %577 = vmatprep.subr.mxu0 0.0
  %578 = vmatpush1.msra.mxu0 0.0
  %579 = vmatprep.subr.mxu0 0.0
  %580 = vmatpush1.msra.mxu0 0.0
  %581 = vmatprep.subr.mxu0 0.0
  %582 = vmatpush1.msra.mxu0 0.0
  %583 = vmatprep.subr.mxu0 0.0
  %584 = vmatpush1.msra.mxu0 0.0
  %585 = vmatprep.subr.mxu0 0.0
  %586 = vmatpush1.msra.mxu0 0.0
  %587 = vmatprep.subr.mxu0 0.0
  %588 = vmatpush1.msra.mxu0 0.0
  %589 = vmatprep.subr.mxu0 0.0
  %590 = vmatpush1.msra.mxu0 0.0
  %591 = vmatprep.subr.mxu0 0.0
  %592 = vmatpush1.msra.mxu0 0.0
  %593 = vmatprep.subr.mxu0 0.0
  %594 = vmatpush1.msra.mxu0 0.0
  %595 = vmatprep.subr.mxu0 0.0
  %596 = vmatpush1.msra.mxu0 0.0
  %597 = vmatprep.subr.mxu0 0.0
  %598 = vmatpush1.msra.mxu0 0.0
  %599 = vmatprep.subr.mxu0 0.0
  %600 = vmatpush1.msra.mxu0 0.0
  %601 = vmatprep.subr.mxu0 0.0
  %602 = vmatpush1.msra.mxu0 0.0
  %603 = vmatprep.subr.mxu0 0.0
  %604 = vmatpush1.msra.mxu0 0.0
  %605 = vmatprep.subr.mxu0 0.0
  %606 = vmatpush1.msra.mxu0 0.0
  %607 = vmatprep.subr.mxu0 0.0
  %608 = vmatpush1.msra.mxu0 0.0
  %609 = vmatprep.subr.mxu0 0.0
  %610 = vmatpush1.msra.mxu0 0.0
  %611 = vmatprep.subr.mxu0 0.0
  %612 = vmatpush1.msra.mxu0 0.0
  %613 = vmatprep.subr.mxu0 0.0
  %614 = vmatpush1.msra.mxu0 0.0
  %615 = vmatprep.subr.mxu0 0.0
  %616 = vmatpush1.msra.mxu0 0.0
  %617 = vmatprep.subr.mxu0 0.0
  %618 = vmatpush1.msra.mxu0 0.0
  %619 = vmatprep.subr.mxu0 0.0
  %620 = vmatpush1.msra.mxu0 0.0
  %621 = vmatprep.subr.mxu0 0.0
  %622 = vmatpush1.msra.mxu0 0.0
  %623 = vmatprep.subr.mxu0 0.0
  %624 = vmatpush1.msra.mxu0 0.0
  %625 = vmatprep.subr.mxu0 0.0
  %626 = vmatpush1.msra.mxu0 0.0
  %627 = vmatprep.mubr.f32.mxu0 0.0
  %v628 = vand.u32 %v78, 4294901760
  %629 = vmatmul.mubr.f32.gmra.mrb[0].mxu0 %v628
  %v630 = vpop.f32.mrb[0].mxu0
  %v631 = vadd.f32 %v543, %v630
  %v632 = vpop.f32.mrb[0].mxu0
  %v633 = vadd.f32 %v545, %v632
  %634 = vmatprep.mubr.f32.mxu0 0.0
  %v635 = vand.u32 %v81, 4294901760
  %636 = vmatmul.mubr.f32.gmra.mrb[0].mxu0 %v635
  %v637 = vpop.f32.mrb[0].mxu0
  %v638 = vadd.f32 %v550, %v637
  %v639 = vpop.f32.mrb[0].mxu0
  %v640 = vadd.f32 %v552, %v639
  %641 = vmatprep.mubr.f32.mxu0 0.0
  %v642 = vand.u32 %v84, 4294901760
  %643 = vmatmul.mubr.f32.gmra.mrb[0].mxu0 %v642
  %v644 = vpop.f32.mrb[0].mxu0
  %v645 = vadd.f32 %v557, %v644
  %v646 = vpop.f32.mrb[0].mxu0
  %v647 = vadd.f32 %v559, %v646
  %648 = vdwg.mxu0
  %649 = vmatprep.subr.mxu0 0.0
  %v650 = vand.u32 %v75, 4294901760
  %651 = vmatpush1.msra.mxu0 %v650
  %652 = vmatprep.subr.mxu0 0.0
  %653 = vmatpush1.msra.mxu0 0.0
  %654 = vmatprep.subr.mxu0 0.0
  %655 = vmatpush1.msra.mxu0 0.0
  %656 = vmatprep.subr.mxu0 0.0
  %657 = vmatpush1.msra.mxu0 0.0
  %658 = vmatprep.subr.mxu0 0.0
  %659 = vmatpush1.msra.mxu0 0.0
  %660 = vmatprep.subr.mxu0 0.0
  %661 = vmatpush1.msra.mxu0 0.0
  %662 = vmatprep.subr.mxu0 0.0
  %663 = vmatpush1.msra.mxu0 0.0
  %664 = vmatprep.subr.mxu0 0.0
  %665 = vmatpush1.msra.mxu0 0.0
  %666 = vmatprep.subr.mxu0 0.0
  %667 = vmatpush1.msra.mxu0 0.0
  %668 = vmatprep.subr.mxu0 0.0
  %669 = vmatpush1.msra.mxu0 0.0
  %670 = vmatprep.subr.mxu0 0.0
  %671 = vmatpush1.msra.mxu0 0.0
  %672 = vmatprep.subr.mxu0 0.0
  %673 = vmatpush1.msra.mxu0 0.0
  %674 = vmatprep.subr.mxu0 0.0
  %675 = vmatpush1.msra.mxu0 0.0
  %676 = vmatprep.subr.mxu0 0.0
  %677 = vmatpush1.msra.mxu0 0.0
  %678 = vmatprep.subr.mxu0 0.0
  %679 = vmatpush1.msra.mxu0 0.0
  %680 = vmatprep.subr.mxu0 0.0
  %681 = vmatpush1.msra.mxu0 0.0
  %682 = vmatprep.subr.mxu0 0.0
  %683 = vmatpush1.msra.mxu0 0.0
  %684 = vmatprep.subr.mxu0 0.0
  %685 = vmatpush1.msra.mxu0 0.0
  %686 = vmatprep.subr.mxu0 0.0
  %687 = vmatpush1.msra.mxu0 0.0
  %688 = vmatprep.subr.mxu0 0.0
  %689 = vmatpush1.msra.mxu0 0.0
  %690 = vmatprep.subr.mxu0 0.0
  %691 = vmatpush1.msra.mxu0 0.0
  %692 = vmatprep.subr.mxu0 0.0
  %693 = vmatpush1.msra.mxu0 0.0
  %694 = vmatprep.subr.mxu0 0.0
  %695 = vmatpush1.msra.mxu0 0.0
  %696 = vmatprep.subr.mxu0 0.0
  %697 = vmatpush1.msra.mxu0 0.0
  %698 = vmatprep.subr.mxu0 0.0
  %699 = vmatpush1.msra.mxu0 0.0
  %700 = vmatprep.subr.mxu0 0.0
  %701 = vmatpush1.msra.mxu0 0.0
  %702 = vmatprep.subr.mxu0 0.0
  %703 = vmatpush1.msra.mxu0 0.0
  %704 = vmatprep.subr.mxu0 0.0
  %705 = vmatpush1.msra.mxu0 0.0
  %706 = vmatprep.subr.mxu0 0.0
  %707 = vmatpush1.msra.mxu0 0.0
  %708 = vmatprep.subr.mxu0 0.0
  %709 = vmatpush1.msra.mxu0 0.0
  %710 = vmatprep.subr.mxu0 0.0
  %711 = vmatpush1.msra.mxu0 0.0
  %712 = vmatprep.subr.mxu0 0.0
  %713 = vmatpush1.msra.mxu0 0.0
  %714 = vmatprep.mubr.f32.mxu0 0.0
  %v715 = vand.u32 %v78, 4294901760
  %v716 = vsub.f32 %v78, %v715
  %v717 = vand.u32 %v716, 4294901760
  %v718 = vsub.f32 %v716, %v717
  %v719 = vand.u32 %v718, 4294901760
  %720 = vmatmul.mubr.f32.gmra.mrb[0].mxu0 %v719
  %v721 = vpop.f32.mrb[0].mxu0
  %v722 = vadd.f32 0.0, %v721
  %v723 = vpop.f32.mrb[0].mxu0
  %724 = vmatprep.mubr.f32.mxu0 0.0
  %v725 = vand.u32 %v81, 4294901760
  %v726 = vsub.f32 %v81, %v725
  %v727 = vand.u32 %v726, 4294901760
  %v728 = vsub.f32 %v726, %v727
  %v729 = vand.u32 %v728, 4294901760
  %730 = vmatmul.mubr.f32.gmra.mrb[0].mxu0 %v729
  %v731 = vpop.f32.mrb[0].mxu0
  %v732 = vadd.f32 0.0, %v731
  %v733 = vpop.f32.mrb[0].mxu0
  %734 = vmatprep.mubr.f32.mxu0 0.0
  %v735 = vand.u32 %v84, 4294901760
  %v736 = vsub.f32 %v84, %v735
  %v737 = vand.u32 %v736, 4294901760
  %v738 = vsub.f32 %v736, %v737
  %v739 = vand.u32 %v738, 4294901760
  %740 = vmatmul.mubr.f32.gmra.mrb[0].mxu0 %v739
  %v741 = vpop.f32.mrb[0].mxu0
  %v742 = vadd.f32 0.0, %v741
  %v743 = vpop.f32.mrb[0].mxu0
  %744 = vdwg.mxu0
  %745 = vmatprep.subr.mxu0 0.0
  %v746 = vand.u32 %v75, 4294901760
  %v747 = vsub.f32 %v75, %v746
  %v748 = vand.u32 %v747, 4294901760
  %v749 = vsub.f32 %v747, %v748
  %v750 = vand.u32 %v749, 4294901760
  %751 = vmatpush1.msra.mxu0 %v750
  %752 = vmatprep.subr.mxu0 0.0
  %753 = vmatpush1.msra.mxu0 0.0
  %754 = vmatprep.subr.mxu0 0.0
  %755 = vmatpush1.msra.mxu0 0.0
  %756 = vmatprep.subr.mxu0 0.0
  %757 = vmatpush1.msra.mxu0 0.0
  %758 = vmatprep.subr.mxu0 0.0
  %759 = vmatpush1.msra.mxu0 0.0
  %760 = vmatprep.subr.mxu0 0.0
  %761 = vmatpush1.msra.mxu0 0.0
  %762 = vmatprep.subr.mxu0 0.0
  %763 = vmatpush1.msra.mxu0 0.0
  %764 = vmatprep.subr.mxu0 0.0
  %765 = vmatpush1.msra.mxu0 0.0
  %766 = vmatprep.subr.mxu0 0.0
  %767 = vmatpush1.msra.mxu0 0.0
  %768 = vmatprep.subr.mxu0 0.0
  %769 = vmatpush1.msra.mxu0 0.0
  %770 = vmatprep.subr.mxu0 0.0
  %771 = vmatpush1.msra.mxu0 0.0
  %772 = vmatprep.subr.mxu0 0.0
  %773 = vmatpush1.msra.mxu0 0.0
  %774 = vmatprep.subr.mxu0 0.0
  %775 = vmatpush1.msra.mxu0 0.0
  %776 = vmatprep.subr.mxu0 0.0
  %777 = vmatpush1.msra.mxu0 0.0
  %778 = vmatprep.subr.mxu0 0.0
  %779 = vmatpush1.msra.mxu0 0.0
  %780 = vmatprep.subr.mxu0 0.0
  %781 = vmatpush1.msra.mxu0 0.0
  %782 = vmatprep.subr.mxu0 0.0
  %783 = vmatpush1.msra.mxu0 0.0
  %784 = vmatprep.subr.mxu0 0.0
  %785 = vmatpush1.msra.mxu0 0.0
  %786 = vmatprep.subr.mxu0 0.0
  %787 = vmatpush1.msra.mxu0 0.0
  %788 = vmatprep.subr.mxu0 0.0
  %789 = vmatpush1.msra.mxu0 0.0
  %790 = vmatprep.subr.mxu0 0.0
  %791 = vmatpush1.msra.mxu0 0.0
  %792 = vmatprep.subr.mxu0 0.0
  %793 = vmatpush1.msra.mxu0 0.0
  %794 = vmatprep.subr.mxu0 0.0
  %795 = vmatpush1.msra.mxu0 0.0
  %796 = vmatprep.subr.mxu0 0.0
  %797 = vmatpush1.msra.mxu0 0.0
  %798 = vmatprep.subr.mxu0 0.0
  %799 = vmatpush1.msra.mxu0 0.0
  %800 = vmatprep.subr.mxu0 0.0
  %801 = vmatpush1.msra.mxu0 0.0
  %802 = vmatprep.subr.mxu0 0.0
  %803 = vmatpush1.msra.mxu0 0.0
  %804 = vmatprep.subr.mxu0 0.0
  %805 = vmatpush1.msra.mxu0 0.0
  %806 = vmatprep.subr.mxu0 0.0
  %807 = vmatpush1.msra.mxu0 0.0
  %808 = vmatprep.subr.mxu0 0.0
  %809 = vmatpush1.msra.mxu0 0.0
  %810 = vmatprep.subr.mxu0 0.0
  %811 = vmatpush1.msra.mxu0 0.0
  %812 = vmatprep.subr.mxu0 0.0
  %813 = vmatpush1.msra.mxu0 0.0
  %814 = vmatprep.mubr.f32.mxu0 0.0
  %v815 = vand.u32 %v78, 4294901760
  %816 = vmatmul.mubr.f32.gmra.mrb[0].mxu0 %v815
  %v817 = vpop.f32.mrb[0].mxu0
  %v818 = vadd.f32 %v722, %v817
  %v819 = vpop.f32.mrb[0].mxu0
  %820 = vmatprep.mubr.f32.mxu0 0.0
  %v821 = vand.u32 %v81, 4294901760
  %822 = vmatmul.mubr.f32.gmra.mrb[0].mxu0 %v821
  %v823 = vpop.f32.mrb[0].mxu0
  %v824 = vadd.f32 %v732, %v823
  %v825 = vpop.f32.mrb[0].mxu0
  %826 = vmatprep.mubr.f32.mxu0 0.0
  %v827 = vand.u32 %v84, 4294901760
  %828 = vmatmul.mubr.f32.gmra.mrb[0].mxu0 %v827
  %v829 = vpop.f32.mrb[0].mxu0
  %v830 = vadd.f32 %v742, %v829
  %v831 = vpop.f32.mrb[0].mxu0
  %832 = vdwg.mxu0
  %833 = vmatprep.subr.mxu0 0.0
  %v834 = vand.u32 %v75, 4294901760
  %v835 = vsub.f32 %v75, %v834
  %836 = vmatpush1.msra.mxu0 %v835
  %837 = vmatprep.subr.mxu0 0.0
  %838 = vmatpush1.msra.mxu0 0.0
  %839 = vmatprep.subr.mxu0 0.0
  %840 = vmatpush1.msra.mxu0 0.0
  %841 = vmatprep.subr.mxu0 0.0
  %842 = vmatpush1.msra.mxu0 0.0
  %843 = vmatprep.subr.mxu0 0.0
  %844 = vmatpush1.msra.mxu0 0.0
  %845 = vmatprep.subr.mxu0 0.0
  %846 = vmatpush1.msra.mxu0 0.0
  %847 = vmatprep.subr.mxu0 0.0
  %848 = vmatpush1.msra.mxu0 0.0
  %849 = vmatprep.subr.mxu0 0.0
  %850 = vmatpush1.msra.mxu0 0.0
  %851 = vmatprep.subr.mxu0 0.0
  %852 = vmatpush1.msra.mxu0 0.0
  %853 = vmatprep.subr.mxu0 0.0
  %854 = vmatpush1.msra.mxu0 0.0
  %855 = vmatprep.subr.mxu0 0.0
  %856 = vmatpush1.msra.mxu0 0.0
  %857 = vmatprep.subr.mxu0 0.0
  %858 = vmatpush1.msra.mxu0 0.0
  %859 = vmatprep.subr.mxu0 0.0
  %860 = vmatpush1.msra.mxu0 0.0
  %861 = vmatprep.subr.mxu0 0.0
  %862 = vmatpush1.msra.mxu0 0.0
  %863 = vmatprep.subr.mxu0 0.0
  %864 = vmatpush1.msra.mxu0 0.0
  %865 = vmatprep.subr.mxu0 0.0
  %866 = vmatpush1.msra.mxu0 0.0
  %867 = vmatprep.subr.mxu0 0.0
  %868 = vmatpush1.msra.mxu0 0.0
  %869 = vmatprep.subr.mxu0 0.0
  %870 = vmatpush1.msra.mxu0 0.0
  %871 = vmatprep.subr.mxu0 0.0
  %872 = vmatpush1.msra.mxu0 0.0
  %873 = vmatprep.subr.mxu0 0.0
  %874 = vmatpush1.msra.mxu0 0.0
  %875 = vmatprep.subr.mxu0 0.0
  %876 = vmatpush1.msra.mxu0 0.0
  %877 = vmatprep.subr.mxu0 0.0
  %878 = vmatpush1.msra.mxu0 0.0
  %879 = vmatprep.subr.mxu0 0.0
  %880 = vmatpush1.msra.mxu0 0.0
  %881 = vmatprep.subr.mxu0 0.0
  %882 = vmatpush1.msra.mxu0 0.0
  %883 = vmatprep.subr.mxu0 0.0
  %884 = vmatpush1.msra.mxu0 0.0
  %885 = vmatprep.subr.mxu0 0.0
  %886 = vmatpush1.msra.mxu0 0.0
  %887 = vmatprep.subr.mxu0 0.0
  %888 = vmatpush1.msra.mxu0 0.0
  %889 = vmatprep.subr.mxu0 0.0
  %890 = vmatpush1.msra.mxu0 0.0
  %891 = vmatprep.subr.mxu0 0.0
  %892 = vmatpush1.msra.mxu0 0.0
  %893 = vmatprep.subr.mxu0 0.0
  %894 = vmatpush1.msra.mxu0 0.0
  %895 = vmatprep.subr.mxu0 0.0
  %896 = vmatpush1.msra.mxu0 0.0
  %897 = vmatprep.subr.mxu0 0.0
  %898 = vmatpush1.msra.mxu0 0.0
  %899 = vmatprep.mubr.f32.mxu0 0.0
  %v900 = vand.u32 %v78, 4294901760
  %v901 = vsub.f32 %v78, %v900
  %902 = vmatmul.mubr.f32.gmra.mrb[0].mxu0 %v901
  %v903 = vpop.f32.mrb[0].mxu0
  %v904 = vadd.f32 %v818, %v903
  %v905 = vpop.f32.mrb[0].mxu0
  %906 = vmatprep.mubr.f32.mxu0 0.0
  %v907 = vand.u32 %v81, 4294901760
  %v908 = vsub.f32 %v81, %v907
  %909 = vmatmul.mubr.f32.gmra.mrb[0].mxu0 %v908
  %v910 = vpop.f32.mrb[0].mxu0
  %v911 = vadd.f32 %v824, %v910
  %v912 = vpop.f32.mrb[0].mxu0
  %913 = vmatprep.mubr.f32.mxu0 0.0
  %v914 = vand.u32 %v84, 4294901760
  %v915 = vsub.f32 %v84, %v914
  %916 = vmatmul.mubr.f32.gmra.mrb[0].mxu0 %v915
  %v917 = vpop.f32.mrb[0].mxu0
  %v918 = vadd.f32 %v830, %v917
  %v919 = vpop.f32.mrb[0].mxu0
  %920 = vdwg.mxu0
  %921 = vmatprep.subr.mxu0 0.0
  %v922 = vand.u32 %v75, 4294901760
  %923 = vmatpush1.msra.mxu0 %v922
  %924 = vmatprep.subr.mxu0 0.0
  %925 = vmatpush1.msra.mxu0 0.0
  %926 = vmatprep.subr.mxu0 0.0
  %927 = vmatpush1.msra.mxu0 0.0
  %928 = vmatprep.subr.mxu0 0.0
  %929 = vmatpush1.msra.mxu0 0.0
  %930 = vmatprep.subr.mxu0 0.0
  %931 = vmatpush1.msra.mxu0 0.0
  %932 = vmatprep.subr.mxu0 0.0
  %933 = vmatpush1.msra.mxu0 0.0
  %934 = vmatprep.subr.mxu0 0.0
  %935 = vmatpush1.msra.mxu0 0.0
  %936 = vmatprep.subr.mxu0 0.0
  %937 = vmatpush1.msra.mxu0 0.0
  %938 = vmatprep.subr.mxu0 0.0
  %939 = vmatpush1.msra.mxu0 0.0
  %940 = vmatprep.subr.mxu0 0.0
  %941 = vmatpush1.msra.mxu0 0.0
  %942 = vmatprep.subr.mxu0 0.0
  %943 = vmatpush1.msra.mxu0 0.0
  %944 = vmatprep.subr.mxu0 0.0
  %945 = vmatpush1.msra.mxu0 0.0
  %946 = vmatprep.subr.mxu0 0.0
  %947 = vmatpush1.msra.mxu0 0.0
  %948 = vmatprep.subr.mxu0 0.0
  %949 = vmatpush1.msra.mxu0 0.0
  %950 = vmatprep.subr.mxu0 0.0
  %951 = vmatpush1.msra.mxu0 0.0
  %952 = vmatprep.subr.mxu0 0.0
  %953 = vmatpush1.msra.mxu0 0.0
  %954 = vmatprep.subr.mxu0 0.0
  %955 = vmatpush1.msra.mxu0 0.0
  %956 = vmatprep.subr.mxu0 0.0
  %957 = vmatpush1.msra.mxu0 0.0
  %958 = vmatprep.subr.mxu0 0.0
  %959 = vmatpush1.msra.mxu0 0.0
  %960 = vmatprep.subr.mxu0 0.0
  %961 = vmatpush1.msra.mxu0 0.0
  %962 = vmatprep.subr.mxu0 0.0
  %963 = vmatpush1.msra.mxu0 0.0
  %964 = vmatprep.subr.mxu0 0.0
  %965 = vmatpush1.msra.mxu0 0.0
  %966 = vmatprep.subr.mxu0 0.0
  %967 = vmatpush1.msra.mxu0 0.0
  %968 = vmatprep.subr.mxu0 0.0
  %969 = vmatpush1.msra.mxu0 0.0
  %970 = vmatprep.subr.mxu0 0.0
  %971 = vmatpush1.msra.mxu0 0.0
  %972 = vmatprep.subr.mxu0 0.0
  %973 = vmatpush1.msra.mxu0 0.0
  %974 = vmatprep.subr.mxu0 0.0
  %975 = vmatpush1.msra.mxu0 0.0
  %976 = vmatprep.subr.mxu0 0.0
  %977 = vmatpush1.msra.mxu0 0.0
  %978 = vmatprep.subr.mxu0 0.0
  %979 = vmatpush1.msra.mxu0 0.0
  %980 = vmatprep.subr.mxu0 0.0
  %981 = vmatpush1.msra.mxu0 0.0
  %982 = vmatprep.subr.mxu0 0.0
  %983 = vmatpush1.msra.mxu0 0.0
  %984 = vmatprep.subr.mxu0 0.0
  %985 = vmatpush1.msra.mxu0 0.0
  %986 = vmatprep.mubr.f32.mxu0 0.0
  %v987 = vand.u32 %v78, 4294901760
  %v988 = vsub.f32 %v78, %v987
  %v989 = vand.u32 %v988, 4294901760
  %990 = vmatmul.mubr.f32.gmra.mrb[0].mxu0 %v989
  %v991 = vpop.f32.mrb[0].mxu0
  %v992 = vadd.f32 %v904, %v991
  %v993 = vpop.f32.mrb[0].mxu0
  %994 = vmatprep.mubr.f32.mxu0 0.0
  %v995 = vand.u32 %v81, 4294901760
  %v996 = vsub.f32 %v81, %v995
  %v997 = vand.u32 %v996, 4294901760
  %998 = vmatmul.mubr.f32.gmra.mrb[0].mxu0 %v997
  %v999 = vpop.f32.mrb[0].mxu0
  %v1000 = vadd.f32 %v911, %v999
  %v1001 = vpop.f32.mrb[0].mxu0
  %1002 = vmatprep.mubr.f32.mxu0 0.0
  %v1003 = vand.u32 %v84, 4294901760
  %v1004 = vsub.f32 %v84, %v1003
  %v1005 = vand.u32 %v1004, 4294901760
  %1006 = vmatmul.mubr.f32.gmra.mrb[0].mxu0 %v1005
  %v1007 = vpop.f32.mrb[0].mxu0
  %v1008 = vadd.f32 %v918, %v1007
  %v1009 = vpop.f32.mrb[0].mxu0
  %1010 = vdwg.mxu0
  %1011 = vmatprep.subr.mxu0 0.0
  %v1012 = vand.u32 %v75, 4294901760
  %v1013 = vsub.f32 %v75, %v1012
  %v1014 = vand.u32 %v1013, 4294901760
  %1015 = vmatpush1.msra.mxu0 %v1014
  %1016 = vmatprep.subr.mxu0 0.0
  %1017 = vmatpush1.msra.mxu0 0.0
  %1018 = vmatprep.subr.mxu0 0.0
  %1019 = vmatpush1.msra.mxu0 0.0
  %1020 = vmatprep.subr.mxu0 0.0
  %1021 = vmatpush1.msra.mxu0 0.0
  %1022 = vmatprep.subr.mxu0 0.0
  %1023 = vmatpush1.msra.mxu0 0.0
  %1024 = vmatprep.subr.mxu0 0.0
  %1025 = vmatpush1.msra.mxu0 0.0
  %1026 = vmatprep.subr.mxu0 0.0
  %1027 = vmatpush1.msra.mxu0 0.0
  %1028 = vmatprep.subr.mxu0 0.0
  %1029 = vmatpush1.msra.mxu0 0.0
  %1030 = vmatprep.subr.mxu0 0.0
  %1031 = vmatpush1.msra.mxu0 0.0
  %1032 = vmatprep.subr.mxu0 0.0
  %1033 = vmatpush1.msra.mxu0 0.0
  %1034 = vmatprep.subr.mxu0 0.0
  %1035 = vmatpush1.msra.mxu0 0.0
  %1036 = vmatprep.subr.mxu0 0.0
  %1037 = vmatpush1.msra.mxu0 0.0
  %1038 = vmatprep.subr.mxu0 0.0
  %1039 = vmatpush1.msra.mxu0 0.0
  %1040 = vmatprep.subr.mxu0 0.0
  %1041 = vmatpush1.msra.mxu0 0.0
  %1042 = vmatprep.subr.mxu0 0.0
  %1043 = vmatpush1.msra.mxu0 0.0
  %1044 = vmatprep.subr.mxu0 0.0
  %1045 = vmatpush1.msra.mxu0 0.0
  %1046 = vmatprep.subr.mxu0 0.0
  %1047 = vmatpush1.msra.mxu0 0.0
  %1048 = vmatprep.subr.mxu0 0.0
  %1049 = vmatpush1.msra.mxu0 0.0
  %1050 = vmatprep.subr.mxu0 0.0
  %1051 = vmatpush1.msra.mxu0 0.0
  %1052 = vmatprep.subr.mxu0 0.0
  %1053 = vmatpush1.msra.mxu0 0.0
  %1054 = vmatprep.subr.mxu0 0.0
  %1055 = vmatpush1.msra.mxu0 0.0
  %1056 = vmatprep.subr.mxu0 0.0
  %1057 = vmatpush1.msra.mxu0 0.0
  %1058 = vmatprep.subr.mxu0 0.0
  %1059 = vmatpush1.msra.mxu0 0.0
  %1060 = vmatprep.subr.mxu0 0.0
  %1061 = vmatpush1.msra.mxu0 0.0
  %1062 = vmatprep.subr.mxu0 0.0
  %1063 = vmatpush1.msra.mxu0 0.0
  %1064 = vmatprep.subr.mxu0 0.0
  %1065 = vmatpush1.msra.mxu0 0.0
  %1066 = vmatprep.subr.mxu0 0.0
  %1067 = vmatpush1.msra.mxu0 0.0
  %1068 = vmatprep.subr.mxu0 0.0
  %1069 = vmatpush1.msra.mxu0 0.0
  %1070 = vmatprep.subr.mxu0 0.0
  %1071 = vmatpush1.msra.mxu0 0.0
  %1072 = vmatprep.subr.mxu0 0.0
  %1073 = vmatpush1.msra.mxu0 0.0
  %1074 = vmatprep.subr.mxu0 0.0
  %1075 = vmatpush1.msra.mxu0 0.0
  %1076 = vmatprep.subr.mxu0 0.0
  %1077 = vmatpush1.msra.mxu0 0.0
  %1078 = vmatprep.mubr.f32.mxu0 0.0
  %v1079 = vand.u32 %v78, 4294901760
  %1080 = vmatmul.mubr.f32.gmra.mrb[0].mxu0 %v1079
  %v1081 = vpop.f32.mrb[0].mxu0
  %v1082 = vadd.f32 %v992, %v1081
  %v1083 = vpop.f32.mrb[0].mxu0
  %1084 = vmatprep.mubr.f32.mxu0 0.0
  %v1085 = vand.u32 %v81, 4294901760
  %1086 = vmatmul.mubr.f32.gmra.mrb[0].mxu0 %v1085
  %v1087 = vpop.f32.mrb[0].mxu0
  %v1088 = vadd.f32 %v1000, %v1087
  %v1089 = vpop.f32.mrb[0].mxu0
  %1090 = vmatprep.mubr.f32.mxu0 0.0
  %v1091 = vand.u32 %v84, 4294901760
  %1092 = vmatmul.mubr.f32.gmra.mrb[0].mxu0 %v1091
  %v1093 = vpop.f32.mrb[0].mxu0
  %v1094 = vadd.f32 %v1008, %v1093
  %v1095 = vpop.f32.mrb[0].mxu0
  %1096 = vdwg.mxu0
  %1097 = vmatprep.subr.mxu0 0.0
  %v1098 = vand.u32 %v75, 4294901760
  %1099 = vmatpush1.msra.mxu0 %v1098
  %1100 = vmatprep.subr.mxu0 0.0
  %1101 = vmatpush1.msra.mxu0 0.0
  %1102 = vmatprep.subr.mxu0 0.0
  %1103 = vmatpush1.msra.mxu0 0.0
  %1104 = vmatprep.subr.mxu0 0.0
  %1105 = vmatpush1.msra.mxu0 0.0
  %1106 = vmatprep.subr.mxu0 0.0
  %1107 = vmatpush1.msra.mxu0 0.0
  %1108 = vmatprep.subr.mxu0 0.0
  %1109 = vmatpush1.msra.mxu0 0.0
  %1110 = vmatprep.subr.mxu0 0.0
  %1111 = vmatpush1.msra.mxu0 0.0
  %1112 = vmatprep.subr.mxu0 0.0
  %1113 = vmatpush1.msra.mxu0 0.0
  %1114 = vmatprep.subr.mxu0 0.0
  %1115 = vmatpush1.msra.mxu0 0.0
  %1116 = vmatprep.subr.mxu0 0.0
  %1117 = vmatpush1.msra.mxu0 0.0
  %1118 = vmatprep.subr.mxu0 0.0
  %1119 = vmatpush1.msra.mxu0 0.0
  %1120 = vmatprep.subr.mxu0 0.0
  %1121 = vmatpush1.msra.mxu0 0.0
  %1122 = vmatprep.subr.mxu0 0.0
  %1123 = vmatpush1.msra.mxu0 0.0
  %1124 = vmatprep.subr.mxu0 0.0
  %1125 = vmatpush1.msra.mxu0 0.0
  %1126 = vmatprep.subr.mxu0 0.0
  %1127 = vmatpush1.msra.mxu0 0.0
  %1128 = vmatprep.subr.mxu0 0.0
  %1129 = vmatpush1.msra.mxu0 0.0
  %1130 = vmatprep.subr.mxu0 0.0
  %1131 = vmatpush1.msra.mxu0 0.0
  %1132 = vmatprep.subr.mxu0 0.0
  %1133 = vmatpush1.msra.mxu0 0.0
  %1134 = vmatprep.subr.mxu0 0.0
  %1135 = vmatpush1.msra.mxu0 0.0
  %1136 = vmatprep.subr.mxu0 0.0
  %1137 = vmatpush1.msra.mxu0 0.0
  %1138 = vmatprep.subr.mxu0 0.0
  %1139 = vmatpush1.msra.mxu0 0.0
  %1140 = vmatprep.subr.mxu0 0.0
  %1141 = vmatpush1.msra.mxu0 0.0
  %1142 = vmatprep.subr.mxu0 0.0
  %1143 = vmatpush1.msra.mxu0 0.0
  %1144 = vmatprep.subr.mxu0 0.0
  %1145 = vmatpush1.msra.mxu0 0.0
  %1146 = vmatprep.subr.mxu0 0.0
  %1147 = vmatpush1.msra.mxu0 0.0
  %1148 = vmatprep.subr.mxu0 0.0
  %1149 = vmatpush1.msra.mxu0 0.0
  %1150 = vmatprep.subr.mxu0 0.0
  %1151 = vmatpush1.msra.mxu0 0.0
  %1152 = vmatprep.subr.mxu0 0.0
  %1153 = vmatpush1.msra.mxu0 0.0
  %1154 = vmatprep.subr.mxu0 0.0
  %1155 = vmatpush1.msra.mxu0 0.0
  %1156 = vmatprep.subr.mxu0 0.0
  %1157 = vmatpush1.msra.mxu0 0.0
  %1158 = vmatprep.subr.mxu0 0.0
  %1159 = vmatpush1.msra.mxu0 0.0
  %1160 = vmatprep.subr.mxu0 0.0
  %1161 = vmatpush1.msra.mxu0 0.0
  %1162 = vmatprep.mubr.f32.mxu0 0.0
  %v1163 = vand.u32 %v78, 4294901760
  %1164 = vmatmul.mubr.f32.gmra.mrb[0].mxu0 %v1163
  %v1165 = vpop.f32.mrb[0].mxu0
  %v1166 = vadd.f32 %v1082, %v1165
  %v1167 = vpop.f32.mrb[0].mxu0
  %1168 = vmatprep.mubr.f32.mxu0 0.0
  %v1169 = vand.u32 %v81, 4294901760
  %1170 = vmatmul.mubr.f32.gmra.mrb[0].mxu0 %v1169
  %v1171 = vpop.f32.mrb[0].mxu0
  %v1172 = vadd.f32 %v1088, %v1171
  %v1173 = vpop.f32.mrb[0].mxu0
  %1174 = vmatprep.mubr.f32.mxu0 0.0
  %v1175 = vand.u32 %v84, 4294901760
  %1176 = vmatmul.mubr.f32.gmra.mrb[0].mxu0 %v1175
  %v1177 = vpop.f32.mrb[0].mxu0
  %v1178 = vadd.f32 %v1094, %v1177
  %v1179 = vpop.f32.mrb[0].mxu0
  %1180 = vdwg.mxu0
  %v1181 = vld [vmem:[%s59] sm:$0x7]
  %v1183 = vlaneseq
  %v1184 = vshrl.u32 %v1183, 7
  %v1185 = vsub.s32 0, %v1184
  %v1186 = vrot.slane %v1181, %v1185
  %v1187 = vlaneseq
  %v1188 = vshrl.u32 %v1187, 7
  %v1189 = vsub.s32 1, %v1188
  %v1190 = vrot.slane %v1181, %v1189
  %v1191 = vlaneseq
  %v1192 = vshrl.u32 %v1191, 7
  %v1193 = vsub.s32 2, %v1192
  %v1194 = vrot.slane %v1181, %v1193
  %v1198 = vsub.f32 %v631, %v1186
  %v1199 = vsub.f32 %v633, %v1190
  %v1200 = vsub.f32 %v1166, %v1194
  %v1201 = vsub.f32 %v638, %v1186
  %v1202 = vsub.f32 %v640, %v1190
  %v1203 = vsub.f32 %v1172, %v1194
  %v1204 = vsub.f32 %v645, %v1186
  %v1205 = vsub.f32 %v647, %v1190
  %v1206 = vsub.f32 %v1178, %v1194
  %v1207 = vld [vmem:[%s1] sm:$0xff]
  %v1208 = vld [vmem:[%s1 + $0x8] sm:$0xff]
  %v1209 = vld [vmem:[%s1 + $0x10] sm:$0xff]
  %1211 = vset.pattern.permute.xlu0 0
  %1212 = vperm.xlu0 %1211, %v1207
  %v1213 = vpop.permute.xlu0 %1212
  %1216 = vset.pattern.permute.xlu0 0
  %1217 = vperm.xlu0 %1216, %v1208
  %v1218 = vpop.permute.xlu0 %1217
  %1221 = vset.pattern.permute.xlu0 0
  %1222 = vperm.xlu0 %1221, %v1209
  %v1223 = vpop.permute.xlu0 %1222
  %v1225 = vsub.f32 %v1198, %v1213
  %v1226 = vsub.f32 %v1199, %v1213
  %v1227 = vsub.f32 %v1200, %v1213
  %v1228 = vsub.f32 %v1201, %v1218
  %v1229 = vsub.f32 %v1202, %v1218
  %v1230 = vsub.f32 %v1203, %v1218
  %v1231 = vsub.f32 %v1204, %v1223
  %v1232 = vsub.f32 %v1205, %v1223
  %v1233 = vsub.f32 %v1206, %v1223
  %v1234 = vmin.f32 %v1225, 0.0
  %v1235 = vmin.f32 %v1226, 0.0
  %v1236 = vmin.f32 %v1227, 0.0
  %v1237 = vmin.f32 %v1228, 0.0
  %v1238 = vmin.f32 %v1229, 0.0
  %v1239 = vmin.f32 %v1230, 0.0
  %v1240 = vmin.f32 %v1231, 0.0
  %v1241 = vmin.f32 %v1232, 0.0
  %v1242 = vmin.f32 %v1233, 0.0
  %v1243 = vmul.f32 %v1234, 1.442695
  %v1244 = vpow.pop %v1243
  %v1245 = vmul.f32 %v1235, 1.442695
  %v1246 = vpow.pop %v1245
  %v1247 = vmul.f32 %v1236, 1.442695
  %v1248 = vpow.pop %v1247
  %v1249 = vmul.f32 %v1237, 1.442695
  %v1250 = vpow.pop %v1249
  %v1251 = vmul.f32 %v1238, 1.442695
  %v1252 = vpow.pop %v1251
  %v1253 = vmul.f32 %v1239, 1.442695
  %v1254 = vpow.pop %v1253
  %v1255 = vmul.f32 %v1240, 1.442695
  %v1256 = vpow.pop %v1255
  %v1257 = vmul.f32 %v1241, 1.442695
  %v1258 = vpow.pop %v1257
  %v1259 = vmul.f32 %v1242, 1.442695
  %v1260 = vpow.pop %v1259
  %v1261 = vadd.f32 %v1244, %v1246
  %v1262 = vadd.f32 %v1261, %v1248
  %1263 = vadd.xlane.f32.xlu0 %v1262
  %v1264 = vpop.xlane.xlu0 %1263
  %v1265 = vadd.f32 %v1250, %v1252
  %v1266 = vadd.f32 %v1265, %v1254
  %1267 = vadd.xlane.f32.xlu0 %v1266
  %v1268 = vpop.xlane.xlu0 %1267
  %v1269 = vadd.f32 %v1256, %v1258
  %v1270 = vadd.f32 %v1269, %v1260
  %1271 = vadd.xlane.f32.xlu0 %v1270
  %v1272 = vpop.xlane.xlu0 %1271
  %v1273 = vld [vmem:[#allocation2] sm:$0xff]
  %v1274 = vld [vmem:[#allocation2 + $0x8] sm:$0xff]
  %v1275 = vld [vmem:[#allocation2 + $0x10] sm:$0xff]
  %v1276 = vadd.f32 %v1273, %v1264
  %v1277 = vadd.f32 %v1274, %v1268
  %v1278 = vadd.f32 %v1275, %v1272
  %vm1279 = vcmask 7168
  %1280 = vst.msk [vmem:[#allocation2] sm:$0xff] %vm1279, %v1276
  %1281 = vst.msk [vmem:[#allocation2 + $0x8] sm:$0xff] %vm1279, %v1277
  %1282 = vst.msk [vmem:[#allocation2 + $0x10] sm:$0xff] %vm1279, %v1278
  // Predicated region
  $region26: #{tpu_custom_call.1} parent=0 // pred_check
    %p1283 = pneg %p62
  $region27: #{tpu_custom_call.1} parent=0 // pred_check_branch
    %1285 = sbr.rel (%p1283) target = $region29
  $region28: #{tpu_custom_call.1} parent=0 // pred_region
    %v1286 = vld [vmem:[#allocation2] sm:$0xff]
    %v1287 = vld [vmem:[#allocation2 + $0x8] sm:$0xff]
    %v1288 = vld [vmem:[#allocation2 + $0x10] sm:$0xff]
    %s1289 = sld [smem:[#allocation3]]
    %v1290 = vstv %s1289
    %v1291 = vmul.f32 %v1286, %v1290
    %v1292 = vmul.f32 %v1287, %v1290
    %v1293 = vmul.f32 %v1288, %v1290
    %1294 = vst.msk [vmem:[%s5] sm:$0xff] %vm1279, %v1291
    %1295 = vst.msk [vmem:[%s5 + $0x8] sm:$0xff] %vm1279, %v1292
    %1296 = vst.msk [vmem:[%s5 + $0x10] sm:$0xff] %vm1279, %v1293
  $region29: #{tpu_custom_call.1} parent=0 // pred_fallthru
    _
  // Predicated region
  $region30: #{tpu_custom_call.1} parent=0 // pred_check
    _
  $region31: #{tpu_custom_call.1} parent=0 // pred_check_branch
    %1298 = sbr.rel (0) target = $region33
  $region32: #{tpu_custom_call.1} parent=0 // pred_region
    _
  $region33: #{tpu_custom_call.1} parent=0 // pred_fallthru
    _
  // Predicated region
  $region34: #{tpu_custom_call.1} parent=0 // pred_check
    _
  $region35: #{tpu_custom_call.1} parent=0 // pred_check_branch
    %1300 = sbr.rel (0) target = $region37
  $region36: #{tpu_custom_call.1} parent=0 // pred_region
    _
  $region37: #{tpu_custom_call.1} parent=0 // pred_fallthru
    _

</llo_original>
